<compile_context>
chip_gen: v5e
topology: v5e:2x2
jax: 0.10.0
libtpu: 0.0.40
codegen_flags: <defaults>
</compile_context>

<pallas_src>
import jax
import jax.numpy as jnp
import numpy as np
from jax.experimental import pallas as pl
from jax.experimental.pallas import tpu as pltpu


def outconv_kernel(x_ref, w_ref, b_ref, o_ref):
    # x_ref: (NB, Cin, TN)   -- spatial positions lane-dense
    # w_ref: (Cout, Cin)
    # b_ref: (Cout, 1)
    # o_ref: (NB, Cout, TN)
    w = w_ref[...]
    bcol = b_ref[...]
    nb = x_ref.shape[0]  # small, static -> unrolled 2-D MXU matmuls
    for i in range(nb):
        y = jnp.dot(w, x_ref[i], preferred_element_type=jnp.float32)
        o_ref[i] = (y + bcol).astype(o_ref.dtype)


def outconv_pallas(x_nchw, w, b, *, tn_max=2048, block_budget_bytes=4 << 20):
    """1x1 conv.  x_nchw: (N, Cin, H, W), w: (Cout, Cin), b: (Cout,).

    Returns (N, Cout, H, W)."""
    N, Cin, H, W = x_nchw.shape
    Cout = w.shape[0]
    R = H * W
    dtype = x_nchw.dtype
    itemsize = jnp.dtype(dtype).itemsize

    # NCHW -> (N, Cin, R): pure reshape, no transpose / extra HBM pass.
    x_rows = x_nchw.reshape(N, Cin, R)

    # ---- spatial lane tile: multiple of 128, capped, shrunk if VMEM-heavy ----
    r_128 = ((R + 127) // 128) * 128
    tn = min(tn_max, r_128)
    per_lane = (Cin + Cout) * itemsize  # bytes per lane of (input + output) block
    while tn > 128 and per_lane * tn > block_budget_bytes:
        tn -= 128
    n_tiles = pl.cdiv(R, tn)
    R_full = n_tiles * tn

    # ---- batch block: pack several samples per grid step if a sample is 1 tile ----
    if n_tiles == 1:
        per_sample = per_lane * tn
        nb = int(max(1, min(N, 8, block_budget_bytes // max(per_sample, 1))))
    else:
        nb = 1
    n_bblocks = pl.cdiv(N, nb)
    N_full = n_bblocks * nb

    pad_r = R_full - R
    pad_n = N_full - N
    if pad_r or pad_n:
        x_rows = jnp.pad(x_rows, ((0, pad_n), (0, 0), (0, pad_r)))

    b_col = b.reshape(Cout, 1)

    out_rows = pl.pallas_call(
        outconv_kernel,
        out_shape=jax.ShapeDtypeStruct((N_full, Cout, R_full), dtype),
        grid_spec=pltpu.PrefetchScalarGridSpec(
            num_scalar_prefetch=0,
            grid=(n_bblocks, n_tiles),
            in_specs=[
                # (nb, Cin, tn): channels on sublanes, spatial tile lane-dense.
                pl.BlockSpec((nb, Cin, tn), lambda nblk, j: (nblk, 0, j)),
                pl.BlockSpec((Cout, Cin), lambda nblk, j: (0, 0)),  # weights, resident
                pl.BlockSpec((Cout, 1), lambda nblk, j: (0, 0)),    # bias, resident
            ],
            out_specs=pl.BlockSpec((nb, Cout, tn), lambda nblk, j: (nblk, 0, j)),
        ),
        compiler_params=pltpu.CompilerParams(
            dimension_semantics=("parallel", "parallel")),
    )(x_rows, w, b_col)

    out_rows = out_rows[:N, :, :R]
    return out_rows.reshape(N, Cout, H, W)


def outconv_ref(x_nchw, w, b):
    """Pure-JAX reference for verification."""
    y = jnp.einsum("oi,nihw->nohw", w, x_nchw)
    return y + b.reshape(1, -1, 1, 1)


def make_params(key, in_channels, out_channels):
    """Deterministic synthetic parameters mirroring nn.Conv2d(kernel_size=1) init."""
    kw, kb = jax.random.split(key)
    bound = 1.0 / np.sqrt(in_channels)  # kernel_size=1 -> fan_in = in_channels
    w = jax.random.uniform(kw, (out_channels, in_channels), jnp.float32, -bound, bound)
    b = jax.random.uniform(kb, (out_channels,), jnp.float32, -bound, bound)
    return w, b


if __name__ == "__main__":
    key = jax.random.PRNGKey(0)
    k_x, k_p = jax.random.split(key)

    # Small shapes consistent with the module: N=2, in_channels=4, out_channels=2, H=W=16
    N, Cin, Cout, H, W = 2, 4, 2, 16, 16
    x = jax.random.normal(k_x, (N, Cin, H, W), jnp.float32)
    w, b = make_params(k_p, Cin, Cout)

    out = outconv_pallas(x, w, b)
    out = jax.block_until_ready(out)

    ref = outconv_ref(x, w, b)
    assert out.shape == (N, Cout, H, W)
    np.testing.assert_allclose(np.asarray(out), np.asarray(ref), rtol=1e-5, atol=1e-5)

    print("KERNEL_OK")
</pallas_src>

<mosaic_0001>
module attributes {stable_mosaic.version = 11 : i64} {
  func.func @outconv_kernel(%arg0: i32, %arg1: i32, %arg2: memref<2x4x256xf32, #tpu.memory_space<vmem>>, %arg3: memref<2x4xf32, #tpu.memory_space<vmem>>, %arg4: memref<2x1xf32, #tpu.memory_space<vmem>>, %arg5: memref<2x2x256xf32, #tpu.memory_space<vmem>>) attributes {dimension_semantics = [#tpu.dimension_semantics<parallel>, #tpu.dimension_semantics<parallel>], iteration_bounds = array<i64: 1, 1>, scalar_prefetch = 0 : i64, scratch_operands = 0 : i64, tpu.core_type = #tpu.core_type<tc>, window_params = [{transform_indices = @transform_0, window_bounds = array<i64: 2, 4, 256>}, {pipeline_mode = #tpu.pipeline_mode<synchronous>, transform_indices = @transform_1, window_bounds = array<i64: 2, 4>}, {pipeline_mode = #tpu.pipeline_mode<synchronous>, transform_indices = @transform_2, window_bounds = array<i64: 2, 1>}, {transform_indices = @transform_3, window_bounds = array<i64: 2, 2, 256>}]} {
    %c0 = arith.constant 0 : index
    %c0_0 = arith.constant 0 : index
    %0 = vector.load %arg3[%c0, %c0_0] : memref<2x4xf32, #tpu.memory_space<vmem>>, vector<2x4xf32>
    %c0_1 = arith.constant 0 : index
    %c0_2 = arith.constant 0 : index
    %1 = vector.load %arg4[%c0_1, %c0_2] : memref<2x1xf32, #tpu.memory_space<vmem>>, vector<2x1xf32>
    %c0_3 = arith.constant 0 : index
    %c0_4 = arith.constant 0 : index
    %c0_5 = arith.constant 0 : index
    %2 = vector.load %arg2[%c0_3, %c0_4, %c0_5] : memref<2x4x256xf32, #tpu.memory_space<vmem>>, vector<1x4x256xf32>
    %3 = vector.shape_cast %2 : vector<1x4x256xf32> to vector<4x256xf32>
    %cst = arith.constant dense<0.000000e+00> : vector<2x256xf32>
    %4 = tpu.matmul %0, %3, %cst {dimension_numbers = #tpu.dot_dimension_numbers<[1], [0], [0], [1], [0, 0, 1, 1], [], []>} : vector<2x4xf32>, vector<4x256xf32>, vector<2x256xf32> -> vector<2x256xf32>
    %5 = vector.broadcast %1 : vector<2x1xf32> to vector<2x256xf32>
    %6 = arith.addf %4, %5 : vector<2x256xf32>
    %c0_6 = arith.constant 0 : index
    %c0_7 = arith.constant 0 : index
    %c0_8 = arith.constant 0 : index
    %7 = vector.load %arg5[%c0_6, %c0_7, %c0_8] : memref<2x2x256xf32, #tpu.memory_space<vmem>>, vector<1x2x256xf32>
    %8 = vector.shape_cast %7 : vector<1x2x256xf32> to vector<2x256xf32>
    %9 = vector.shape_cast %6 : vector<2x256xf32> to vector<1x2x256xf32>
    tpu.vector_store %arg5[%c0_6, %c0_7, %c0_8], %9 {strides = array<i32>} : memref<2x2x256xf32, #tpu.memory_space<vmem>>, vector<1x2x256xf32>,
    %c1 = arith.constant 1 : index
    %c0_9 = arith.constant 0 : index
    %c0_10 = arith.constant 0 : index
    %10 = vector.load %arg2[%c1, %c0_9, %c0_10] : memref<2x4x256xf32, #tpu.memory_space<vmem>>, vector<1x4x256xf32>
    %11 = vector.shape_cast %10 : vector<1x4x256xf32> to vector<4x256xf32>
    %cst_11 = arith.constant dense<0.000000e+00> : vector<2x256xf32>
    %12 = tpu.matmul %0, %11, %cst_11 {dimension_numbers = #tpu.dot_dimension_numbers<[1], [0], [0], [1], [0, 0, 1, 1], [], []>} : vector<2x4xf32>, vector<4x256xf32>, vector<2x256xf32> -> vector<2x256xf32>
    %13 = vector.broadcast %1 : vector<2x1xf32> to vector<2x256xf32>
    %14 = arith.addf %12, %13 : vector<2x256xf32>
    %c1_12 = arith.constant 1 : index
    %c0_13 = arith.constant 0 : index
    %c0_14 = arith.constant 0 : index
    %15 = vector.load %arg5[%c1_12, %c0_13, %c0_14] : memref<2x2x256xf32, #tpu.memory_space<vmem>>, vector<1x2x256xf32>
    %16 = vector.shape_cast %15 : vector<1x2x256xf32> to vector<2x256xf32>
    %17 = vector.shape_cast %14 : vector<2x256xf32> to vector<1x2x256xf32>
    tpu.vector_store %arg5[%c1_12, %c0_13, %c0_14], %17 {strides = array<i32>} : memref<2x2x256xf32, #tpu.memory_space<vmem>>, vector<1x2x256xf32>,
    return
  }
  func.func @transform_0(%arg0: i32, %arg1: i32) -> (i32, i32, i32) {
    %c0_i32 = arith.constant 0 : i32
    %c0_i32_0 = arith.constant 0 : i32
    return %arg0, %c0_i32, %arg1 : i32, i32, i32
  }
  func.func @transform_1(%arg0: i32, %arg1: i32) -> (i32, i32) {
    %c0_i32 = arith.constant 0 : i32
    %c0_i32_0 = arith.constant 0 : i32
    %c0_i32_1 = arith.constant 0 : i32
    return %c0_i32, %c0_i32_0 : i32, i32
  }
  func.func @transform_2(%arg0: i32, %arg1: i32) -> (i32, i32) {
    %c0_i32 = arith.constant 0 : i32
    %c0_i32_0 = arith.constant 0 : i32
    %c0_i32_1 = arith.constant 0 : i32
    return %c0_i32, %c0_i32_0 : i32, i32
  }
  func.func @transform_3(%arg0: i32, %arg1: i32) -> (i32, i32, i32) {
    %c0_i32 = arith.constant 0 : i32
    %c0_i32_0 = arith.constant 0 : i32
    return %arg0, %c0_i32, %arg1 : i32, i32, i32
  }
}

</mosaic_0001>

<llo_original>
// kernel: tpu_custom_call.1
$region0: #{tpu_custom_call.1}
  #allocation0 [shape = 'u32[]', space=smem, size = 0x4, offset = 0x4, fixed_abs, tag = 'smem constant byte address 0x4 - core index']
  #allocation1 [shape = 'u32[72,128]{1,0:T(1,128)}', space=vmem, size = 0x9000, scoped, tag = 'internal scratch']
  %s0 = inlined_call_operand.hbm [shape: f32[2,4,256], index: 0, kind: input, shape index: {}]
  %s1 = inlined_call_operand.vmem [shape: f32[2,4], index: 1, kind: input, shape index: {}]
  %s2 = inlined_call_operand.vmem [shape: f32[2,1], index: 2, kind: input, shape index: {}]
  %s3 = inlined_call_operand.hbm [shape: f32[2,2,256], index: 3, kind: output, shape index: {}]
  %s4 = sld [smem:[#allocation0]]
  $region26: #{tpu_custom_call.1} parent=0
    _
  %s6 = ssub.s32 1, %s4
  %s7 = scalar_select 0, %s6, %s4
  $region1: #{tpu_custom_call.1} parent=0
    #allocation2 [shape = 'u8[8192]{0}', space=vmem, size = 0x2000, scoped, tag = 'input window, operand 0, single buffered']
    #allocation3 [shape = 's32[1]{0}', space=sflag, size = 0x4, scoped, tag = 'scoped memory for tpu_custom_call.1']
    #allocation4 [shape = 's32[1]{0}', space=sflag, size = 0x4, scoped, tag = 'scoped memory for tpu_custom_call.1']
    #allocation5 [shape = 'u8[4096]{0}', space=vmem, size = 0x1000, scoped, tag = 'output window, operand 0, single buffered']
    %8 = vsyncpa [#allocation3], 0
    %9 = vsyncpa [#allocation4], 0
    // Predicated region
    $region2: #{tpu_custom_call.1} parent=1 // pred_check
      _
    $region3: #{tpu_custom_call.1} parent=1 // pred_check_branch
      %11 = sbr.rel (0) target = $region5
    $region4: #{tpu_custom_call.1} parent=1 // pred_region
      %13 = vsyncadd [#allocation3], 0
      %s14 = sshll.u32 %s0, 4
      %s15 = int_to_ptr.hbm [resolvable:$true] %s14
      %s16 = sshll.u32 [#allocation2], 4
      %s17 = int_to_ptr.vmem [resolvable:$true] %s16
      %22 = dma.hbm_to_vmem [thread:$0]  %s15, 256, %s17, [#allocation3], 128, 128, 8
    $region5: #{tpu_custom_call.1} parent=1 // pred_fallthru
      _
    // Predicated region
    $region6: #{tpu_custom_call.1} parent=1 // pred_check
      _
    $region7: #{tpu_custom_call.1} parent=1 // pred_check_branch
      %24 = sbr.rel (0) target = $region9
    $region8: #{tpu_custom_call.1} parent=1 // pred_region
      _
    $region9: #{tpu_custom_call.1} parent=1 // pred_fallthru
      _
    // Predicated region
    $region10: #{tpu_custom_call.1} parent=1 // pred_check
      _
    $region11: #{tpu_custom_call.1} parent=1 // pred_check_branch
      %26 = sbr.rel (0) target = $region13
    $region12: #{tpu_custom_call.1} parent=1 // pred_region
      _
    $region13: #{tpu_custom_call.1} parent=1 // pred_fallthru
      _
    // Predicated region
    $region14: #{tpu_custom_call.1} parent=1 // pred_check
      _
    $region15: #{tpu_custom_call.1} parent=1 // pred_check_branch
      %28 = sbr.rel (0) target = $region17
    $region16: #{tpu_custom_call.1} parent=1 // pred_region
      %30 = dma.done [#allocation3], 256
    $region17: #{tpu_custom_call.1} parent=1 // pred_fallthru
      _
    %v31 = vld [vmem:[%s1] sm:$0x3]
    %v32 = vld [vmem:[%s2] sm:$0x3]
    %v33 = vld [vmem:[#allocation2] sm:$0xff]
    %35 = vset.pattern.permute.xlu0 0
    %36 = vperm.xlu0 %35, %v32
    %v37 = vpop.permute.xlu0 %36
    %40 = vst [vmem:[#allocation1] ss:$2 sm:$0xff] %v33
    %v41 = vld.sshfl [vmem:[#allocation1] sm:$0xff pattern:$0x75316420]
    %v42 = vld.sshfl [vmem:[#allocation1 + $0x8] sm:$0xff pattern:$0x75316420]
    %vm43 = vcmask 31744
    %v45 = vsel %vm43, %v31, 0
    %vm47 = vcmask 1043456
    %v48 = vsel %vm47, %v41, 0
    %v50 = vsel %vm47, %v42, 0
    %52 = vmatpush.msra.mxu0 0.0
    %53 = vmatpush.msra.mxu0 0.0
    %54 = vmatpush.msra.mxu0 0.0
    %55 = vmatpush.msra.mxu0 0.0
    %56 = vmatpush.msra.mxu0 0.0
    %57 = vmatpush.msra.mxu0 0.0
    %58 = vmatpush.msra.mxu0 0.0
    %59 = vmatpush.msra.mxu0 0.0
    %60 = vmatpush.msra.mxu0 0.0
    %61 = vmatpush.msra.mxu0 0.0
    %62 = vmatpush.msra.mxu0 0.0
    %63 = vmatpush.msra.mxu0 0.0
    %64 = vmatpush.msra.mxu0 0.0
    %65 = vmatpush.msra.mxu0 0.0
    %66 = vmatpush.msra.mxu0 0.0
    %67 = vmatpush.msra.mxu0 %v48
    %68 = vmatmul.f32.gmra.mxu0 %v45
    %v69 = vpop.f32.mrf.mxu0
    %v70 = vadd.f32 %v37, %v69
    %71 = vdwg.mxu0
    %72 = vmatpush.msra.mxu0 0.0
    %73 = vmatpush.msra.mxu0 0.0
    %74 = vmatpush.msra.mxu0 0.0
    %75 = vmatpush.msra.mxu0 0.0
    %76 = vmatpush.msra.mxu0 0.0
    %77 = vmatpush.msra.mxu0 0.0
    %78 = vmatpush.msra.mxu0 0.0
    %79 = vmatpush.msra.mxu0 0.0
    %80 = vmatpush.msra.mxu0 0.0
    %81 = vmatpush.msra.mxu0 0.0
    %82 = vmatpush.msra.mxu0 0.0
    %83 = vmatpush.msra.mxu0 0.0
    %84 = vmatpush.msra.mxu0 0.0
    %85 = vmatpush.msra.mxu0 0.0
    %86 = vmatpush.msra.mxu0 0.0
    %87 = vmatpush.msra.mxu0 %v50
    %88 = vmatmul.f32.gmra.mxu0 %v45
    %v89 = vpop.f32.mrf.mxu0
    %v90 = vadd.f32 %v37, %v89
    %91 = vdwg.mxu0
    %v94 = vrot.slane %v90, 6
    %vm95 = vcmask 1041408
    %v96 = vsel %vm95, %v70, %v94
    %98 = vst [vmem:[#allocation5] sm:$0xf] %v96
    %s99 = scalar_lea.vmem [#allocation2], 8
    %v100 = vld [vmem:[%s99] sm:$0xff]
    %102 = vst [vmem:[#allocation1] ss:$2 sm:$0xff] %v100
    %v103 = vld.sshfl [vmem:[#allocation1] sm:$0xff pattern:$0x75316420]
    %v104 = vld.sshfl [vmem:[#allocation1 + $0x8] sm:$0xff pattern:$0x75316420]
    %v105 = vsel %vm47, %v103, 0
    %v107 = vsel %vm47, %v104, 0
    %109 = vmatpush.msra.mxu0 0.0
    %110 = vmatpush.msra.mxu0 0.0
    %111 = vmatpush.msra.mxu0 0.0
    %112 = vmatpush.msra.mxu0 0.0
    %113 = vmatpush.msra.mxu0 0.0
    %114 = vmatpush.msra.mxu0 0.0
    %115 = vmatpush.msra.mxu0 0.0
    %116 = vmatpush.msra.mxu0 0.0
    %117 = vmatpush.msra.mxu0 0.0
    %118 = vmatpush.msra.mxu0 0.0
    %119 = vmatpush.msra.mxu0 0.0
    %120 = vmatpush.msra.mxu0 0.0
    %121 = vmatpush.msra.mxu0 0.0
    %122 = vmatpush.msra.mxu0 0.0
    %123 = vmatpush.msra.mxu0 0.0
    %124 = vmatpush.msra.mxu0 %v105
    %125 = vmatmul.f32.gmra.mxu0 %v45
    %v126 = vpop.f32.mrf.mxu0
    %v127 = vadd.f32 %v37, %v126
    %128 = vdwg.mxu0
    %129 = vmatpush.msra.mxu0 0.0
    %130 = vmatpush.msra.mxu0 0.0
    %131 = vmatpush.msra.mxu0 0.0
    %132 = vmatpush.msra.mxu0 0.0
    %133 = vmatpush.msra.mxu0 0.0
    %134 = vmatpush.msra.mxu0 0.0
    %135 = vmatpush.msra.mxu0 0.0
    %136 = vmatpush.msra.mxu0 0.0
    %137 = vmatpush.msra.mxu0 0.0
    %138 = vmatpush.msra.mxu0 0.0
    %139 = vmatpush.msra.mxu0 0.0
    %140 = vmatpush.msra.mxu0 0.0
    %141 = vmatpush.msra.mxu0 0.0
    %142 = vmatpush.msra.mxu0 0.0
    %143 = vmatpush.msra.mxu0 0.0
    %144 = vmatpush.msra.mxu0 %v107
    %145 = vmatmul.f32.gmra.mxu0 %v45
    %v146 = vpop.f32.mrf.mxu0
    %v147 = vadd.f32 %v37, %v146
    %148 = vdwg.mxu0
    %v151 = vrot.slane %v147, 6
    %v152 = vsel %vm95, %v127, %v151
    %s154 = scalar_lea.vmem [#allocation5], 4
    %155 = vst [vmem:[%s154] sm:$0xf] %v152
    // Predicated region
    $region18: #{tpu_custom_call.1} parent=1 // pred_check
      _
    $region19: #{tpu_custom_call.1} parent=1 // pred_check_branch
      %157 = sbr.rel (0) target = $region21
    $region20: #{tpu_custom_call.1} parent=1 // pred_region
      %159 = vsyncadd [#allocation4], 0
      %s160 = sshll.u32 [#allocation5], 4
      %s161 = int_to_ptr.vmem [resolvable:$true] %s160
      %s162 = sshll.u32 %s3, 4
      %s163 = int_to_ptr.hbm [resolvable:$true] %s162
      %168 = dma.vmem_to_hbm [thread:$0]  %s161, 128, %s163, [#allocation4], 64, 64, 4
    $region21: #{tpu_custom_call.1} parent=1 // pred_fallthru
      _
    // Predicated region
    $region22: #{tpu_custom_call.1} parent=1 // pred_check
      _
    $region23: #{tpu_custom_call.1} parent=1 // pred_check_branch
      %170 = sbr.rel (0) target = $region25
    $region24: #{tpu_custom_call.1} parent=1 // pred_region
      %172 = dma.done [#allocation4], 128
    $region25: #{tpu_custom_call.1} parent=1 // pred_fallthru
      _
    %173 = vsyncpa [#allocation3], 1
    %174 = vsyncpa [#allocation4], 1

</llo_original>
